<compile_context>
chip_gen: v6e
topology: v6e:2x2x1
jax: 0.10.0
libtpu: 0.0.40
codegen_flags: <defaults>
</compile_context>

<pallas_src>
import functools

import jax
import jax.numpy as jnp
from jax.experimental import pallas as pl
from jax.experimental.pallas import tpu as pltpu

IGNORE_INDEX = -100


def _vmem_capacity_bytes():
    """Physical VMEM of the local chip; falls back to 128 MiB."""
    try:
        info = pltpu.get_tpu_info()
        cap = getattr(info, "vmem_capacity_bytes", None)
        if cap:
            return int(cap)
    except Exception:
        pass
    return 128 * 1024 * 1024


_VMEM_CAP = _vmem_capacity_bytes()
_TILE_BUDGET = _VMEM_CAP // 4   # bytes the tiling math may plan for
_VMEM_LIMIT = _VMEM_CAP // 2    # scoped-vmem limit handed to Mosaic


def _pick_tiles(n_rows, vocab, itemsize, budget):
    """Pick (tile_rows, tile_vocab).

    tile_rows: multiple of 8, <= 256 (kept large so per-step overhead and DMA
    setup amortize).  tile_vocab: either the full vocab (single chunk, no
    masking) or a multiple of 128 sized so double-buffered input blocks plus
    in-kernel temps fit the budget.
    """
    per_elem = 3 * itemsize + 12          # 2x dbl-buffered input + temps (cons.)
    rows_cap = -(-n_rows // 8) * 8        # rows rounded up to a sublane multiple
    tr = max(8, min(256, rows_cap))

    if vocab <= 128 or tr * vocab * per_elem <= budget:
        return tr, vocab                  # whole vocab fits: single chunk

    tv = (budget // (tr * per_elem)) // 128 * 128
    while tv < 128 and tr > 8:
        tr = max(8, (tr // 2) // 8 * 8)
        tv = (budget // (tr * per_elem)) // 128 * 128
    tv = max(128, tv)
    return tr, min(tv, vocab)


def _ce_kernel(logits_ref, labels_ref, loss_ref, m_acc, s_acc, p_acc, *,
               vocab, chunk, n_chunks):
    """One (batch, row-block, vocab-chunk) step of chunked online logsumexp.

    logits_ref: (1, TR, TV) native-dtype logits chunk
    labels_ref: (1, TR, 1) int32, already shifted, padded with -100
    loss_ref:   (1, 1, 1, 1) f32 per-(batch,row-block) partial loss sum
    m_acc/s_acc/p_acc: (TR, 1) f32 running max / exp-sum / picked-logit
    """
    v_idx = pl.program_id(2)

    @pl.when(v_idx == 0)
    def _():
        m_acc[...] = jnp.full(m_acc.shape, -jnp.inf, dtype=m_acc.dtype)
        s_acc[...] = jnp.zeros(s_acc.shape, dtype=s_acc.dtype)
        p_acc[...] = jnp.zeros(p_acc.shape, dtype=p_acc.dtype)

    x = logits_ref[0]                       # (TR, TV) native dtype
    lbl = labels_ref[0]                     # (TR, 1)  int32

    # Global vocab id of each lane in this chunk; built as (1, TV) and
    # broadcast against the (TR, 1) labels (no (TR, TV) iota materialized).
    vocab_iota = (jax.lax.broadcasted_iota(jnp.int32, (1, x.shape[-1]), 1)
                  + v_idx * chunk)

    if n_chunks > 1 and vocab % chunk != 0:
        # Last chunk reads past V: mask tail lanes with a very negative finite
        # value so they contribute exp(...) -> 0 without inf-inf NaNs.
        neg_min = jnp.asarray(jnp.finfo(x.dtype).min, dtype=x.dtype)
        x = jnp.where(vocab_iota < vocab, x, neg_min)

    onehot = vocab_iota == lbl              # (TR, TV) via broadcast

    # Per-chunk stable softmax pieces; elementwise work stays in the native
    # dtype, only the exp operand / reduction accumulators are f32.
    m_chunk = jnp.max(x, axis=-1, keepdims=True)            # (TR, 1) native
    xm = x - m_chunk                                         # native dtype
    s_chunk = jnp.sum(jnp.exp(xm.astype(jnp.float32)),
                      axis=-1, keepdims=True)                # (TR, 1) f32
    p_chunk = jnp.sum(jnp.where(onehot, x, jnp.zeros((), dtype=x.dtype)),
                      axis=-1, keepdims=True, dtype=jnp.float32)

    # Online logsumexp merge into the f32 (TR, 1) accumulators.
    m_prev = m_acc[...]
    m_cf = m_chunk.astype(jnp.float32)
    m_new = jnp.maximum(m_prev, m_cf)
    s_acc[...] = (s_acc[...] * jnp.exp(m_prev - m_new)
                  + s_chunk * jnp.exp(m_cf - m_new))
    p_acc[...] = p_acc[...] + p_chunk       # exact: single nonzero term per row
    m_acc[...] = m_new

    @pl.when(v_idx == n_chunks - 1)
    def _():
        lse = m_acc[...] + jnp.log(s_acc[...])               # (TR, 1) f32
        valid = lbl != IGNORE_INDEX
        # Select (not multiply) so NaN/Inf from padded / out-of-bounds rows
        # never propagates into the sum.
        row_loss = jnp.where(valid, lse - p_acc[...], 0.0)
        loss_ref[0, 0] = jnp.sum(row_loss, keepdims=True)    # (1, 1) store


@functools.partial(jax.jit, static_argnames=("tile_rows", "tile_vocab"))
def cross_entropy_loss(logits, labels, tile_rows=None, tile_vocab=None):
    """logits: (B, S, V) float; labels: (B, S) int -> scalar float32."""
    B, S, V = logits.shape
    if S < 2:
        raise ValueError("need S >= 2 for a shifted LM loss")
    n_rows = S - 1                          # rows that carry loss

    if tile_rows is None or tile_vocab is None:
        tr, tv = _pick_tiles(n_rows, V, logits.dtype.itemsize, _TILE_BUDGET)
        tile_rows = tile_rows if tile_rows is not None else tr
        tile_vocab = tile_vocab if tile_vocab is not None else tv
    assert tile_rows % 8 == 0
    assert tile_vocab == V or tile_vocab % 128 == 0

    rb = -(-n_rows // tile_rows)            # row blocks per batch
    vb = -(-V // tile_vocab)                # vocab chunks
    padded_rows = rb * tile_rows

    # Shift + pad only the tiny labels array; padded rows get ignore_index so
    # they (and any out-of-bounds garbage logits rows) contribute exactly 0.
    shift_labels = labels[:, 1:].astype(jnp.int32)           # (B, S-1)
    pad = padded_rows - n_rows
    if pad:
        shift_labels_p = jnp.pad(shift_labels, ((0, 0), (0, pad)),
                                 constant_values=IGNORE_INDEX)
    else:
        shift_labels_p = shift_labels
    labels3 = shift_labels_p.reshape(B, padded_rows, 1)

    kernel = functools.partial(_ce_kernel, vocab=V, chunk=tile_vocab,
                               n_chunks=vb)

    per_block = pl.pallas_call(
        kernel,
        out_shape=jax.ShapeDtypeStruct((B, rb, 1, 1), jnp.float32),
        grid_spec=pltpu.PrefetchScalarGridSpec(
            num_scalar_prefetch=0,
            grid=(B, rb, vb),
            in_specs=[
                # Shift is implicit: row block r reads logits rows
                # [r*TR, r*TR+TR); rows >= S-1 are masked via ignore labels.
                pl.BlockSpec((1, tile_rows, tile_vocab),
                             lambda b, r, v: (b, r, v)),
                pl.BlockSpec((1, tile_rows, 1), lambda b, r, v: (b, r, 0)),
            ],
            out_specs=pl.BlockSpec((1, 1, 1, 1), lambda b, r, v: (b, r, 0, 0)),
            scratch_shapes=[
                pltpu.VMEM((tile_rows, 1), jnp.float32),   # running max
                pltpu.VMEM((tile_rows, 1), jnp.float32),   # running exp-sum
                pltpu.VMEM((tile_rows, 1), jnp.float32),   # picked logit
            ],
        ),
        compiler_params=pltpu.CompilerParams(
            dimension_semantics=("parallel", "parallel", "arbitrary"),
            vmem_limit_bytes=_VMEM_LIMIT,
        ),
    )(logits, labels3)

    loss_sum = jnp.sum(per_block)
    valid_cnt = jnp.sum((shift_labels != IGNORE_INDEX).astype(jnp.float32))
    # valid_cnt == 0 -> NaN, matching torch's mean-reduction behavior.
    return (loss_sum / valid_cnt).astype(jnp.float32)


def _reference(logits, labels):
    """Pure-JAX reference for sanity checking."""
    B, S, V = logits.shape
    x = logits[..., :-1, :].reshape(-1, V).astype(jnp.float32)
    y = labels[..., 1:].reshape(-1)
    lse = jax.nn.logsumexp(x, axis=-1)
    picked = jnp.take_along_axis(x, jnp.maximum(y, 0)[:, None], axis=-1)[:, 0]
    valid = y != IGNORE_INDEX
    loss = jnp.where(valid, lse - picked, 0.0)
    return jnp.sum(loss) / jnp.sum(valid.astype(jnp.float32))


if __name__ == "__main__":
    key = jax.random.PRNGKey(0)
    keys = jax.random.split(key, 4)

    def run_case(k, B, S, V, dtype=jnp.float32, atol=1e-5, rtol=1e-5, **tiles):
        k1, k2 = jax.random.split(k)
        logits = jax.random.normal(k1, (B, S, V), dtype=jnp.float32).astype(dtype)
        labels = jax.random.randint(k2, (B, S), 0, V, dtype=jnp.int32)
        out = jax.block_until_ready(cross_entropy_loss(logits, labels, **tiles))
        ref = _reference(logits, labels)
        assert bool(jnp.isfinite(out)), (B, S, V, dtype, out)
        assert jnp.allclose(out, ref, rtol=rtol, atol=atol), (B, S, V, dtype, out, ref)

    # 1) small lane-aligned case, single vocab chunk.
    run_case(keys[0], B=2, S=8, V=128)
    # 2) ragged row block ((S-1) % 8 != 0) and vocab not a multiple of 128
    #    (full-dim block): exercises out-of-bounds row masking.
    run_case(keys[1], B=2, S=6, V=160)
    # 3) forced multi-chunk online-logsumexp path with a masked tail chunk.
    run_case(keys[2], B=2, S=8, V=320, tile_rows=8, tile_vocab=128)
    # 4) bf16 logits: elementwise math stays bf16, reductions in f32.
    run_case(keys[3], B=2, S=8, V=128, dtype=jnp.bfloat16, atol=3e-2, rtol=3e-2)

    print("KERNEL_OK")
</pallas_src>

<mosaic_0001>
module attributes {stable_mosaic.version = 11 : i64} {
  func.func @_ce_kernel(%arg0: i32, %arg1: i32, %arg2: i32, %arg3: memref<1x8x128xf32, #tpu.memory_space<vmem>>, %arg4: memref<1x8x1xi32, #tpu.memory_space<vmem>>, %arg5: memref<1x1x1x1xf32, #tpu.memory_space<vmem>>, %arg6: memref<8x1xf32, #tpu.memory_space<vmem>>, %arg7: memref<8x1xf32, #tpu.memory_space<vmem>>, %arg8: memref<8x1xf32, #tpu.memory_space<vmem>>) attributes {dimension_semantics = [#tpu.dimension_semantics<parallel>, #tpu.dimension_semantics<parallel>, #tpu.dimension_semantics<arbitrary>], iteration_bounds = array<i64: 2, 1, 1>, scalar_prefetch = 0 : i64, scratch_operands = 3 : i64, tpu.core_type = #tpu.core_type<tc>, window_params = [{transform_indices = @transform_0, window_bounds = array<i64: 1, 8, 128>}, {transform_indices = @transform_1, window_bounds = array<i64: 1, 8, 1>}, {transform_indices = @transform_2, window_bounds = array<i64: 1, 1, 1, 1>}]} {
    %c0_i32 = arith.constant 0 : i32
    %0 = arith.cmpi eq, %arg2, %c0_i32 : i32
    %1 = arith.extui %0 : i1 to i32
    %c0_i32_0 = arith.constant 0 : i32
    %2 = arith.cmpi ne, %1, %c0_i32_0 : i32
    scf.if %2 {
      %cst_23 = arith.constant 0xFF800000 : f32
      %43 = vector.broadcast %cst_23 : f32 to vector<8x1xf32>
      %c0_24 = arith.constant 0 : index
      %c0_25 = arith.constant 0 : index
      %44 = vector.load %arg6[%c0_24, %c0_25] : memref<8x1xf32, #tpu.memory_space<vmem>>, vector<8x1xf32>
      tpu.vector_store %arg6[%c0_24, %c0_25], %43 {strides = array<i32>} : memref<8x1xf32, #tpu.memory_space<vmem>>, vector<8x1xf32>,
      %cst_26 = arith.constant 0.000000e+00 : f32
      %45 = vector.broadcast %cst_26 : f32 to vector<8x1xf32>
      %c0_27 = arith.constant 0 : index
      %c0_28 = arith.constant 0 : index
      %46 = vector.load %arg7[%c0_27, %c0_28] : memref<8x1xf32, #tpu.memory_space<vmem>>, vector<8x1xf32>
      tpu.vector_store %arg7[%c0_27, %c0_28], %45 {strides = array<i32>} : memref<8x1xf32, #tpu.memory_space<vmem>>, vector<8x1xf32>,
      %cst_29 = arith.constant 0.000000e+00 : f32
      %47 = vector.broadcast %cst_29 : f32 to vector<8x1xf32>
      %c0_30 = arith.constant 0 : index
      %c0_31 = arith.constant 0 : index
      %48 = vector.load %arg8[%c0_30, %c0_31] : memref<8x1xf32, #tpu.memory_space<vmem>>, vector<8x1xf32>
      tpu.vector_store %arg8[%c0_30, %c0_31], %47 {strides = array<i32>} : memref<8x1xf32, #tpu.memory_space<vmem>>, vector<8x1xf32>,
    } else {
    }
    %c0 = arith.constant 0 : index
    %c0_1 = arith.constant 0 : index
    %c0_2 = arith.constant 0 : index
    %3 = vector.load %arg3[%c0, %c0_1, %c0_2] : memref<1x8x128xf32, #tpu.memory_space<vmem>>, vector<1x8x128xf32>
    %4 = vector.shape_cast %3 : vector<1x8x128xf32> to vector<8x128xf32>
    %c0_3 = arith.constant 0 : index
    %c0_4 = arith.constant 0 : index
    %c0_5 = arith.constant 0 : index
    %5 = vector.load %arg4[%c0_3, %c0_4, %c0_5] : memref<1x8x1xi32, #tpu.memory_space<vmem>>, vector<1x8x1xi32>
    %6 = vector.shape_cast %5 : vector<1x8x1xi32> to vector<8x1xi32>
    %7 = tpu.iota {dimensions = array<i32: 1>} : vector<1x128xi32>
    %c128_i32 = arith.constant 128 : i32
    %8 = arith.muli %arg2, %c128_i32 : i32
    %9 = vector.broadcast %8 : i32 to vector<1x128xi32>
    %10 = arith.addi %7, %9 : vector<1x128xi32>
    %11 = vector.broadcast %10 : vector<1x128xi32> to vector<8x128xi32>
    %12 = vector.broadcast %6 : vector<8x1xi32> to vector<8x128xi32>
    %13 = arith.cmpi eq, %11, %12 : vector<8x128xi32>
    %cst = arith.constant dense<0xFF800000> : vector<8xf32>
    %14 = vector.multi_reduction <maximumf>, %4, %cst [1] : vector<8x128xf32> to vector<8xf32>
    %15 = vector.shape_cast %14 : vector<8xf32> to vector<8x1xf32>
    %16 = vector.broadcast %15 : vector<8x1xf32> to vector<8x128xf32>
    %17 = arith.subf %4, %16 : vector<8x128xf32>
    %18 = math.exp %17 : vector<8x128xf32>
    %cst_6 = arith.constant dense<0.000000e+00> : vector<8xf32>
    %19 = vector.multi_reduction <add>, %18, %cst_6 [1] : vector<8x128xf32> to vector<8xf32>
    %20 = vector.shape_cast %19 : vector<8xf32> to vector<8x1xf32>
    %cst_7 = arith.constant 0.000000e+00 : f32
    %21 = vector.broadcast %cst_7 : f32 to vector<8x128xf32>
    %22 = arith.select %13, %4, %21 : vector<8x128xi1>, vector<8x128xf32>
    %cst_8 = arith.constant dense<0.000000e+00> : vector<8xf32>
    %23 = vector.multi_reduction <add>, %22, %cst_8 [1] : vector<8x128xf32> to vector<8xf32>
    %24 = vector.shape_cast %23 : vector<8xf32> to vector<8x1xf32>
    %c0_9 = arith.constant 0 : index
    %c0_10 = arith.constant 0 : index
    %25 = vector.load %arg6[%c0_9, %c0_10] : memref<8x1xf32, #tpu.memory_space<vmem>>, vector<8x1xf32>
    %26 = arith.maximumf %25, %15 : vector<8x1xf32>
    %c0_11 = arith.constant 0 : index
    %c0_12 = arith.constant 0 : index
    %27 = vector.load %arg7[%c0_11, %c0_12] : memref<8x1xf32, #tpu.memory_space<vmem>>, vector<8x1xf32>
    %28 = arith.subf %25, %26 : vector<8x1xf32>
    %29 = math.exp %28 : vector<8x1xf32>
    %30 = arith.mulf %27, %29 : vector<8x1xf32>
    %31 = arith.subf %15, %26 : vector<8x1xf32>
    %32 = math.exp %31 : vector<8x1xf32>
    %33 = arith.mulf %20, %32 : vector<8x1xf32>
    %34 = arith.addf %30, %33 : vector<8x1xf32>
    %c0_13 = arith.constant 0 : index
    %c0_14 = arith.constant 0 : index
    %35 = vector.load %arg7[%c0_13, %c0_14] : memref<8x1xf32, #tpu.memory_space<vmem>>, vector<8x1xf32>
    tpu.vector_store %arg7[%c0_13, %c0_14], %34 {strides = array<i32>} : memref<8x1xf32, #tpu.memory_space<vmem>>, vector<8x1xf32>,
    %c0_15 = arith.constant 0 : index
    %c0_16 = arith.constant 0 : index
    %36 = vector.load %arg8[%c0_15, %c0_16] : memref<8x1xf32, #tpu.memory_space<vmem>>, vector<8x1xf32>
    %37 = arith.addf %36, %24 : vector<8x1xf32>
    %c0_17 = arith.constant 0 : index
    %c0_18 = arith.constant 0 : index
    %38 = vector.load %arg8[%c0_17, %c0_18] : memref<8x1xf32, #tpu.memory_space<vmem>>, vector<8x1xf32>
    tpu.vector_store %arg8[%c0_17, %c0_18], %37 {strides = array<i32>} : memref<8x1xf32, #tpu.memory_space<vmem>>, vector<8x1xf32>,
    %c0_19 = arith.constant 0 : index
    %c0_20 = arith.constant 0 : index
    %39 = vector.load %arg6[%c0_19, %c0_20] : memref<8x1xf32, #tpu.memory_space<vmem>>, vector<8x1xf32>
    tpu.vector_store %arg6[%c0_19, %c0_20], %26 {strides = array<i32>} : memref<8x1xf32, #tpu.memory_space<vmem>>, vector<8x1xf32>,
    %c0_i32_21 = arith.constant 0 : i32
    %40 = arith.cmpi eq, %arg2, %c0_i32_21 : i32
    %41 = arith.extui %40 : i1 to i32
    %c0_i32_22 = arith.constant 0 : i32
    %42 = arith.cmpi ne, %41, %c0_i32_22 : i32
    scf.if %42 {
      %c0_23 = arith.constant 0 : index
      %c0_24 = arith.constant 0 : index
      %43 = vector.load %arg6[%c0_23, %c0_24] : memref<8x1xf32, #tpu.memory_space<vmem>>, vector<8x1xf32>
      %c0_25 = arith.constant 0 : index
      %c0_26 = arith.constant 0 : index
      %44 = vector.load %arg7[%c0_25, %c0_26] : memref<8x1xf32, #tpu.memory_space<vmem>>, vector<8x1xf32>
      %45 = math.log %44 : vector<8x1xf32>
      %46 = arith.addf %43, %45 : vector<8x1xf32>
      %c-100_i32 = arith.constant -100 : i32
      %47 = vector.broadcast %c-100_i32 : i32 to vector<8x1xi32>
      %48 = arith.cmpi ne, %6, %47 : vector<8x1xi32>
      %c0_27 = arith.constant 0 : index
      %c0_28 = arith.constant 0 : index
      %49 = vector.load %arg8[%c0_27, %c0_28] : memref<8x1xf32, #tpu.memory_space<vmem>>, vector<8x1xf32>
      %50 = arith.subf %46, %49 : vector<8x1xf32>
      %cst_29 = arith.constant 0.000000e+00 : f32
      %51 = vector.broadcast %cst_29 : f32 to vector<8x1xf32>
      %52 = arith.select %48, %50, %51 : vector<8x1xi1>, vector<8x1xf32>
      %53 = vector.shape_cast %52 : vector<8x1xf32> to vector<1x8x1xf32>
      %cst_30 = arith.constant dense<0.000000e+00> : vector<1xf32>
      %54 = vector.multi_reduction <add>, %53, %cst_30 [1, 2] : vector<1x8x1xf32> to vector<1xf32>
      %55 = vector.shape_cast %54 : vector<1xf32> to vector<1x1x1xf32>
      %56 = vector.extract %55[0, 0, 0] : f32 from vector<1x1x1xf32>
      %57 = vector.broadcast %56 : f32 to vector<1x1xf32>
      %c0_31 = arith.constant 0 : index
      %c0_32 = arith.constant 0 : index
      %c0_33 = arith.constant 0 : index
      %c0_34 = arith.constant 0 : index
      %58 = vector.load %arg5[%c0_31, %c0_32, %c0_33, %c0_34] : memref<1x1x1x1xf32, #tpu.memory_space<vmem>>, vector<1x1x1x1xf32>
      %59 = vector.shape_cast %58 : vector<1x1x1x1xf32> to vector<1x1xf32>
      %60 = vector.shape_cast %57 : vector<1x1xf32> to vector<1x1x1x1xf32>
      tpu.vector_store %arg5[%c0_31, %c0_32, %c0_33, %c0_34], %60 {strides = array<i32>} : memref<1x1x1x1xf32, #tpu.memory_space<vmem>>, vector<1x1x1x1xf32>,
    } else {
    }
    return
  }
  func.func @transform_0(%arg0: i32, %arg1: i32, %arg2: i32) -> (i32, i32, i32) {
    %c0_i32 = arith.constant 0 : i32
    return %arg0, %arg1, %arg2 : i32, i32, i32
  }
  func.func @transform_1(%arg0: i32, %arg1: i32, %arg2: i32) -> (i32, i32, i32) {
    %c0_i32 = arith.constant 0 : i32
    %c0_i32_0 = arith.constant 0 : i32
    return %arg0, %arg1, %c0_i32 : i32, i32, i32
  }
  func.func @transform_2(%arg0: i32, %arg1: i32, %arg2: i32) -> (i32, i32, i32, i32) {
    %c0_i32 = arith.constant 0 : i32
    %c0_i32_0 = arith.constant 0 : i32
    %c0_i32_1 = arith.constant 0 : i32
    return %arg0, %arg1, %c0_i32, %c0_i32_0 : i32, i32, i32, i32
  }
}

</mosaic_0001>

<llo_original>
// kernel: cross_entropy_loss.1
$region0: #{cross_entropy_loss.1}
  #allocation0 [shape = 'u32[]', space=smem, size = 0x4, offset = 0x4, fixed_abs, tag = 'smem constant byte address 0x4 - core index']
  #allocation1 [shape = 'u32[144,128]{1,0:T(1,128)}', space=vmem, size = 0x12000, scoped, tag = 'internal scratch']
  #allocation2 [shape = 'f32[8,1]{1,0:T(8,128)}', space=vmem, size = 0x1000, scoped, tag = 'scratch operand']
  #allocation3 [shape = 'f32[8,1]{1,0:T(8,128)}', space=vmem, size = 0x1000, scoped, tag = 'scratch operand']
  #allocation4 [shape = 'f32[8,1]{1,0:T(8,128)}', space=vmem, size = 0x1000, scoped, tag = 'scratch operand']
  %s0 = inlined_call_operand.vmem [shape: f32[2,8,128], index: 0, kind: input, shape index: {}]
  %s1 = inlined_call_operand.vmem [shape: s32[2,8,1], index: 1, kind: input, shape index: {}]
  %s2 = inlined_call_operand.vmem [shape: f32[2,1,1,1], index: 2, kind: output, shape index: {}]
  %s3 = sld [smem:[#allocation0]]
  $region49: #{cross_entropy_loss.1} parent=0
    _
  %s5 = ssub.s32 1, %s3
  %s6 = scalar_select 0, %s5, %s3
  loop: start=0, step=1, limit=4
  $region2: #{cross_entropy_loss.1} parent=0 // loop_pre_header
    _
  $region3: #{cross_entropy_loss.1} parent=0 // loop_header
    %s8 = sphi 0, %s12
    %p9 = scmp.ge.s32.totalorder %s8, 4
    %s15 = sphi 0, %s34
    %s16 = sphi 0, %s30
    %s17 = sphi 0, %s26
    %s18 = sphi 0, %s15
    %s19 = sphi 0, %s16
    %s20 = sphi 0, %s17
    %s21 = sphi 0, %s18
    %s22 = sphi 0, %s19
    %s23 = sphi 0, %s20
    %s41 = sphi 0, %s43
    %s44 = sphi 0, %s41
    %s45 = sphi 0, %s44
    %s61 = sphi 0, %s45
    %s69 = sphi 0, %s71
    %s72 = sphi 0, %s69
    %s73 = sphi 0, %s72
    %s89 = sphi 0, %s73
    %s97 = sphi 0, %s99
    %s100 = sphi 0, %s97
    %s101 = sphi 0, %s100
    %s117 = sphi 0, %s101
  $region4: #{cross_entropy_loss.1} parent=0 // loop_header_branch
    %11 = sbr.rel (%p9) target = $region8
  $region5: #{cross_entropy_loss.1} parent=0 // loop_body
    %s13 = ssub.s32 %s8, 1
    %s14 = ssub.s32 %s8, 2
    %s24 = sadd.s32 1, %s17
    %p25 = scmp.ge.s32.totalorder %s24, 1
    %s26 = scalar_select %p25, 0, %s24
    %s27 = sadd.s32 1, %s16
    %s28 = scalar_select %p25, %s27, %s16
    %p29 = scmp.ge.s32.totalorder %s28, 1
    %s30 = scalar_select %p29, 0, %s28
    %s31 = sadd.s32 1, %s15
    %s32 = scalar_select %p29, %s31, %s15
    %p33 = scmp.ge.s32.totalorder %s32, 2
    %s34 = scalar_select %p33, 0, %s32
    %s35 = ssub.s32 %s15, %s34
    %s36 = ssub.s32 %s16, %s30
    %s37 = sor.u32 %s35, %s36
    %s38 = ssub.s32 %s17, %s26
    %s39 = sor.u32 %s37, %s38
    %p40 = scmp.eq.s32.totalorder %s39, 0
    %s42 = sadd.s32 %s41, 1
    %s43 = scalar_select %p40, %s41, %s42
    %p46 = pneg %p40
    %p47 = scmp.eq.s32.totalorder %s8, 1
    %p48 = por %p46, %p47
    %p49 = scmp.ne.s32.totalorder %s41, %s44
    %p50 = scmp.eq.s32.totalorder %s8, 0
    %p51 = por %p49, %p50
    %p52 = scmp.ne.s32.totalorder %s41, %s44
    %p53 = scmp.eq.s32.totalorder %s13, 1
    %p54 = por %p52, %p53
    %p55 = scmp.ne.s32.totalorder %s44, %s45
    %p56 = scmp.eq.s32.totalorder %s13, 0
    %p57 = por %p55, %p56
    %p58 = scmp.ne.s32.totalorder %s44, %s45
    %p59 = scmp.eq.s32.totalorder %s14, 1
    %p60 = por %p58, %p59
    %p62 = scmp.ne.s32.totalorder %s45, %s61
    %p63 = scmp.eq.s32.totalorder %s14, 0
    %p64 = por %p62, %p63
    %s65 = ssub.s32 %s15, %s34
    %s66 = ssub.s32 %s16, %s30
    %s67 = sor.u32 %s65, %s66
    %p68 = scmp.eq.s32.totalorder %s67, 0
    %s70 = sadd.s32 %s69, 1
    %s71 = scalar_select %p68, %s69, %s70
    %p74 = pneg %p68
    %p75 = scmp.eq.s32.totalorder %s8, 1
    %p76 = por %p74, %p75
    %p77 = scmp.ne.s32.totalorder %s69, %s72
    %p78 = scmp.eq.s32.totalorder %s8, 0
    %p79 = por %p77, %p78
    %p80 = scmp.ne.s32.totalorder %s69, %s72
    %p81 = scmp.eq.s32.totalorder %s13, 1
    %p82 = por %p80, %p81
    %p83 = scmp.ne.s32.totalorder %s72, %s73
    %p84 = scmp.eq.s32.totalorder %s13, 0
    %p85 = por %p83, %p84
    %p86 = scmp.ne.s32.totalorder %s72, %s73
    %p87 = scmp.eq.s32.totalorder %s14, 1
    %p88 = por %p86, %p87
    %p90 = scmp.ne.s32.totalorder %s73, %s89
    %p91 = scmp.eq.s32.totalorder %s14, 0
    %p92 = por %p90, %p91
    %s93 = ssub.s32 %s15, %s34
    %s94 = ssub.s32 %s16, %s30
    %s95 = sor.u32 %s93, %s94
    %p96 = scmp.eq.s32.totalorder %s95, 0
    %s98 = sadd.s32 %s97, 1
    %s99 = scalar_select %p96, %s97, %s98
    %p102 = pneg %p96
    %p103 = scmp.eq.s32.totalorder %s8, 1
    %p104 = por %p102, %p103
    %p105 = scmp.ne.s32.totalorder %s97, %s100
    %p106 = scmp.eq.s32.totalorder %s8, 0
    %p107 = por %p105, %p106
    %p108 = scmp.ne.s32.totalorder %s97, %s100
    %p109 = scmp.eq.s32.totalorder %s13, 1
    %p110 = por %p108, %p109
    %p111 = scmp.ne.s32.totalorder %s100, %s101
    %p112 = scmp.eq.s32.totalorder %s13, 0
    %p113 = por %p111, %p112
    %p114 = scmp.ne.s32.totalorder %s100, %s101
    %p115 = scmp.eq.s32.totalorder %s14, 1
    %p116 = por %p114, %p115
    %p118 = scmp.ne.s32.totalorder %s101, %s117
    %p119 = scmp.eq.s32.totalorder %s14, 0
    %p120 = por %p118, %p119
    %p121 = scmp.le.s32.totalorder 1, %s8
    %p122 = scmp.lt.s32.totalorder %s8, 3
    %p123 = pnand %p121, %p122
    %p124 = pneg %p123
    // Predicated region
    $region9: #{cross_entropy_loss.1} parent=5 // pred_check
      _
    $region10: #{cross_entropy_loss.1} parent=5 // pred_check_branch
      %126 = sbr.rel (%p123) target = $region12
    $region11: #{cross_entropy_loss.1} parent=5 // pred_region
      %s127 = ssub.s32 %s8, 1
    $region12: #{cross_entropy_loss.1} parent=5 // pred_fallthru
      _
    %p128 = scmp.lt.s32.totalorder %s8, 2
    // Predicated region
    $region13: #{cross_entropy_loss.1} parent=5 // pred_check
      %p129 = pneg %p128
    $region14: #{cross_entropy_loss.1} parent=5 // pred_check_branch
      %131 = sbr.rel (%p129) target = $region16
    $region15: #{cross_entropy_loss.1} parent=5 // pred_region
      // Predicated region
      $region17: #{cross_entropy_loss.1} parent=15 // pred_check
        %p132 = pneg %p51
      $region18: #{cross_entropy_loss.1} parent=15 // pred_check_branch
        %134 = sbr.rel (%p132) target = $region20
      $region19: #{cross_entropy_loss.1} parent=15 // pred_region
        %p135 = scmp.lt.s32.totalorder %s15, 1
        %s136 = scalar_select %p135, %s15, 1
        %p137 = scmp.lt.s32.totalorder %s16, 0
        %s138 = scalar_select %p137, %s16, 0
        %p139 = scmp.lt.s32.totalorder %s17, 0
        %s140 = scalar_select %p139, %s17, 0
        %s141 = sadd.s32 %s140, %s138
        %s142 = sadd.s32 %s141, %s136
        %s143 = smul.addr %s142, 8
        %s144 = scalar_lea.vmem %s0, %s143
      $region20: #{cross_entropy_loss.1} parent=15 // pred_fallthru
        _
      // Predicated region
      $region21: #{cross_entropy_loss.1} parent=15 // pred_check
        %p145 = pneg %p79
      $region22: #{cross_entropy_loss.1} parent=15 // pred_check_branch
        %147 = sbr.rel (%p145) target = $region24
      $region23: #{cross_entropy_loss.1} parent=15 // pred_region
        %p148 = scmp.lt.s32.totalorder %s15, 1
        %s149 = scalar_select %p148, %s15, 1
        %p150 = scmp.lt.s32.totalorder %s16, 0
        %s151 = scalar_select %p150, %s16, 0
        %s152 = sadd.s32 %s151, %s149
        %s153 = smul.addr %s152, 8
        %s154 = scalar_lea.vmem %s1, %s153
      $region24: #{cross_entropy_loss.1} parent=15 // pred_fallthru
        _
    $region16: #{cross_entropy_loss.1} parent=5 // pred_fallthru
      _
    %p155 = scmp.le.s32.totalorder 1, %s8
    %p156 = scmp.lt.s32.totalorder %s8, 3
    %p157 = pnand %p155, %p156
    %p158 = pneg %p157
    // Predicated region
    $region25: #{cross_entropy_loss.1} parent=5 // pred_check
      _
    $region26: #{cross_entropy_loss.1} parent=5 // pred_check_branch
      %160 = sbr.rel (%p157) target = $region28
    $region27: #{cross_entropy_loss.1} parent=5 // pred_region
      %s161 = ssub.s32 %s8, 1
      %p162 = scmp.lt.s32.totalorder %s18, 1
      %s163 = scalar_select %p162, %s18, 1
      %p164 = scmp.lt.s32.totalorder %s19, 0
      %s165 = scalar_select %p164, %s19, 0
      %p166 = scmp.lt.s32.totalorder %s20, 0
      %s167 = scalar_select %p166, %s20, 0
      %s168 = sadd.s32 %s167, %s165
      %s169 = sadd.s32 %s168, %s163
      %s170 = smul.addr %s169, 8
      %s171 = scalar_lea.vmem %s0, %s170
      %p172 = pneg %p57
      %p173 = pneg %p54
      %p174 = scmp.lt.s32.totalorder %s18, 1
      %s175 = scalar_select %p174, %s18, 1
      %p176 = scmp.lt.s32.totalorder %s19, 0
      %s177 = scalar_select %p176, %s19, 0
      %s178 = sadd.s32 %s177, %s175
      %s179 = smul.addr %s178, 8
      %s180 = scalar_lea.vmem %s1, %s179
      %p181 = pneg %p85
      %p182 = pneg %p82
      %p183 = pneg %p113
      %p184 = pneg %p110
      %p185 = scmp.lt.s32.totalorder %s18, 1
      %s186 = scalar_select %p185, %s18, 1
      %p187 = scmp.lt.s32.totalorder %s19, 0
      %s188 = scalar_select %p187, %s19, 0
      %s189 = sadd.s32 %s188, %s186
      %s190 = scalar_lea.vmem %s2, %s189
      %p191 = scmp.lt.s32.totalorder %s18, 1
      %s192 = scalar_select %p191, %s18, 1
      %p193 = scmp.lt.s32.totalorder %s19, 0
      %s194 = scalar_select %p193, %s19, 0
      %p195 = scmp.lt.s32.totalorder %s20, 0
      %s196 = scalar_select %p195, %s20, 0
      %s197 = sadd.s32 %s196, %s194
      %s198 = sadd.s32 %s197, %s192
      %s199 = smul.addr %s198, 8
      %s200 = scalar_lea.vmem %s0, %s199
      %p201 = scmp.lt.s32.totalorder %s18, 1
      %s202 = scalar_select %p201, %s18, 1
      %p203 = scmp.lt.s32.totalorder %s19, 0
      %s204 = scalar_select %p203, %s19, 0
      %s205 = sadd.s32 %s204, %s202
      %s206 = smul.addr %s205, 8
      %s207 = scalar_lea.vmem %s1, %s206
      %p208 = scmp.lt.s32.totalorder %s18, 1
      %s209 = scalar_select %p208, %s18, 1
      %p210 = scmp.lt.s32.totalorder %s19, 0
      %s211 = scalar_select %p210, %s19, 0
      %s212 = sadd.s32 %s211, %s209
      %s213 = scalar_lea.vmem %s2, %s212
      %p214 = scmp.eq.s32.totalorder %s20, 0
      // Predicated region
      $region29: #{cross_entropy_loss.1} parent=27 // pred_check
        %p215 = pneg %p214
      $region30: #{cross_entropy_loss.1} parent=27 // pred_check_branch
        %217 = sbr.rel (%p215) target = $region32
      $region31: #{cross_entropy_loss.1} parent=27 // pred_region
        %vm218 = vcmask 7168
        %219 = vst.msk [vmem:[#allocation2] sm:$0xff] %vm218, -inf
        %220 = vst.msk [vmem:[#allocation3] sm:$0xff] %vm218, 0.0
        %221 = vst.msk [vmem:[#allocation4] sm:$0xff] %vm218, 0.0
      $region32: #{cross_entropy_loss.1} parent=27 // pred_fallthru
        _
      %v222 = vld [vmem:[%s200] sm:$0xff]
      %v223 = vld [vmem:[%s207] sm:$0xff]
      %v224 = vlaneseq
      %v225 = vand.u32 %v224, 127
      %s226 = smul.u32 %s20, 128
      %v227 = vstv %s226
      %v228 = vadd.s32 %v225, %v227
      %229 = vset.pattern.permute.xlu0 0
      %230 = vperm.xlu0 %229, %v223
      %v231 = vpop.permute.xlu0 %230
      %vm232 = vcmp.eq.s32.totalorder %v228, %v231
      %233 = vmax.xlane.f32.xlu0 %v222
      %v234 = vpop.xlane.xlu0 %233
      %v235 = vsub.f32 %v222, %v234
      %v236 = vmul.f32 %v235, 1.442695
      %v237 = vpow.pop %v236
      %238 = vadd.xlane.f32.xlu0 %v237
      %v239 = vpop.xlane.xlu0 %238
      %v240 = vsel %vm232, %v222, 0.0
      %241 = vadd.xlane.f32.xlu0 %v240
      %v242 = vpop.xlane.xlu0 %241
      %v243 = vld [vmem:[#allocation2] sm:$0xff]
      %v244 = vmax.f32 %v243, %v234
      %v245 = vld [vmem:[#allocation3] sm:$0xff]
      %v246 = vsub.f32 %v243, %v244
      %v247 = vmul.f32 %v246, 1.442695
      %v248 = vpow.pop %v247
      %v249 = vmul.f32 %v245, %v248
      %v250 = vsub.f32 %v234, %v244
      %v251 = vmul.f32 %v250, 1.442695
      %v252 = vpow.pop %v251
      %v253 = vmul.f32 %v239, %v252
      %v254 = vadd.f32 %v249, %v253
      %vm255 = vcmask 7168
      %256 = vst.msk [vmem:[#allocation3] sm:$0xff] %vm255, %v254
      %v257 = vld [vmem:[#allocation4] sm:$0xff]
      %v258 = vadd.f32 %v257, %v242
      %259 = vst.msk [vmem:[#allocation4] sm:$0xff] %vm255, %v258
      %260 = vst.msk [vmem:[#allocation2] sm:$0xff] %vm255, %v244
      // Predicated region
      $region33: #{cross_entropy_loss.1} parent=27 // pred_check
        %p261 = pneg %p214
      $region34: #{cross_entropy_loss.1} parent=27 // pred_check_branch
        %263 = sbr.rel (%p261) target = $region36
      $region35: #{cross_entropy_loss.1} parent=27 // pred_region
        %v264 = vld [vmem:[#allocation2] sm:$0xff]
        %v265 = vld [vmem:[#allocation3] sm:$0xff]
        %v266 = vlog2.pop %v265
        %v267 = vmul.f32 %v266, 0.6931472
        %v268 = vadd.f32 %v264, %v267
        %vm269 = vcmp.ne.s32.totalorder %v223, 4294967196
        %v270 = vld [vmem:[#allocation4] sm:$0xff]
        %v271 = vsub.f32 %v268, %v270
        %v272 = vsel %vm269, %v271, 0.0
        %v273 = vsel %vm255, %v272, 0.0
        %274 = vadd.xlane.f32.xlu0 %v273
        %v275 = vpop.xlane.xlu0 %274
        %v276 = vrot.slane %v275, 4
        %v277 = vadd.f32 %v275, %v276
        %v278 = vrot.slane %v277, 2
        %v279 = vadd.f32 %v277, %v278
        %v280 = vrot.slane %v279, 1
        %v281 = vadd.f32 %v279, %v280
        %s282 = vtos %v281
        %v283 = vstv %s282
        %vm284 = vcmask 0
        %285 = vst.msk [vmem:[%s213] sm:$0x1] %vm284, %v283
      $region36: #{cross_entropy_loss.1} parent=27 // pred_fallthru
        _
      %p286 = scmp.lt.s32.totalorder %s18, 1
      %s287 = scalar_select %p286, %s18, 1
      %p288 = scmp.lt.s32.totalorder %s19, 0
      %s289 = scalar_select %p288, %s19, 0
      %s290 = sadd.s32 %s289, %s287
      %s291 = scalar_lea.vmem %s2, %s290
      // Predicated region
      $region37: #{cross_entropy_loss.1} parent=27 // pred_check
        %p292 = pneg %p110
      $region38: #{cross_entropy_loss.1} parent=27 // pred_check_branch
        %294 = sbr.rel (%p292) target = $region40
      $region39: #{cross_entropy_loss.1} parent=27 // pred_region
        _
      $region40: #{cross_entropy_loss.1} parent=27 // pred_fallthru
        _
    $region28: #{cross_entropy_loss.1} parent=5 // pred_fallthru
      _
    %p295 = scmp.le.s32.totalorder 2, %s8
    // Predicated region
    $region41: #{cross_entropy_loss.1} parent=5 // pred_check
      %p296 = pneg %p295
    $region42: #{cross_entropy_loss.1} parent=5 // pred_check_branch
      %298 = sbr.rel (%p296) target = $region44
    $region43: #{cross_entropy_loss.1} parent=5 // pred_region
      %s299 = ssub.s32 %s8, 2
      // Predicated region
      $region45: #{cross_entropy_loss.1} parent=43 // pred_check
        %p300 = pneg %p116
      $region46: #{cross_entropy_loss.1} parent=43 // pred_check_branch
        %302 = sbr.rel (%p300) target = $region48
      $region47: #{cross_entropy_loss.1} parent=43 // pred_region
        %p303 = scmp.lt.s32.totalorder %s21, 1
        %s304 = scalar_select %p303, %s21, 1
        %p305 = scmp.lt.s32.totalorder %s22, 0
        %s306 = scalar_select %p305, %s22, 0
        %s307 = sadd.s32 %s306, %s304
        %s308 = scalar_lea.vmem %s2, %s307
      $region48: #{cross_entropy_loss.1} parent=43 // pred_fallthru
        _
    $region44: #{cross_entropy_loss.1} parent=5 // pred_fallthru
      _
  $region6: #{cross_entropy_loss.1} parent=0 // loop_footer
    %s12 = sadd.s32 1, %s8
  $region7: #{cross_entropy_loss.1} parent=0 // loop_footer_branch
    %7 = sbr.rel target = $region3
  $region8: #{cross_entropy_loss.1} parent=0 // loop_exit
    _

</llo_original>
